<compile_context>
chip_gen: v7x
topology: tpu7x:2x2x1
jax: 0.10.0
libtpu: 0.0.40
codegen_flags: <defaults>
</compile_context>

<pallas_src>
import functools
import math

import jax
import jax.numpy as jnp
from jax import lax
from jax.experimental import pallas as pl
from jax.experimental.pallas import tpu as pltpu

LN_EPS = 1e-5                 # PyTorch nn.LayerNorm default
NEG_INF = -1e30               # large finite negative: avoids inf-inf NaN in masked softmax


# ----------------------------- small helpers --------------------------------
def _vmem_limit_bytes():
    """Per-chip VMEM limit with headroom (13/16 of capacity: ~52 MiB on v7x,
    ~104 MiB on v5e/v6e). Falls back to 64 MiB if the query is unavailable."""
    try:
        cap = pltpu.get_tpu_info().vmem_capacity_bytes
        return int(cap) * 13 // 16
    except Exception:
        return 64 * 1024 * 1024


def _layer_norm_f32(x, w, b):
    # x: (T, C) f32; w, b: (1, C) f32
    mu = jnp.mean(x, axis=-1, keepdims=True)
    var = jnp.mean((x - mu) ** 2, axis=-1, keepdims=True)
    return (x - mu) * lax.rsqrt(var + LN_EPS) * w + b


def _gelu_tanh(x):
    # GELU(approximate='tanh'), PyTorch formula, f32
    return 0.5 * x * (1.0 + jnp.tanh(0.7978845608028654 * (x + 0.044715 * x * x * x)))


def _largest_tile(dim, cap, step):
    """Largest divisor of `dim` that is <= cap and a multiple of `step` (else full dim)."""
    cap = min(cap, dim)
    cap -= cap % step
    for t in range(cap, 0, -step):
        if dim % t == 0:
            return t
    return dim


# ------------------------- kernel 1: LN1 + QKV proj --------------------------
def _ln_qkv_kernel(x_ref, ln1w_ref, ln1b_ref, wqkv_ref, bqkv_ref, qkv_ref):
    x = x_ref[0].astype(jnp.float32)                          # (TS, C)
    xn = _layer_norm_f32(x, ln1w_ref[...], ln1b_ref[...])     # f32
    qkv = jnp.dot(xn.astype(wqkv_ref.dtype), wqkv_ref[...],
                  preferred_element_type=jnp.float32) + bqkv_ref[...]
    qkv_ref[0] = qkv.astype(qkv_ref.dtype)                    # (TS, 3C)


# ---------------------- kernel 2: flash causal attention ---------------------
def _flash_attn_kernel(q_ref, k_ref, v_ref, o_ref, q_scr, m_s, l_s, acc_s, *,
                       n_head, head_dim, q_tile, kv_tile, scale, approx_recip):
    ki = pl.program_id(2)
    n_k = pl.num_programs(2)
    q_start = pl.program_id(1) * q_tile
    k_start = ki * kv_tile

    @pl.when(ki == 0)
    def _init():
        # Fold 1/sqrt(head_dim) into q once per q-tile (cheaper than scaling s).
        q_scr[...] = (q_ref[0].astype(jnp.float32) * scale).astype(q_scr.dtype)
        m_s[...] = jnp.full_like(m_s, NEG_INF)
        l_s[...] = jnp.zeros_like(l_s)
        acc_s[...] = jnp.zeros_like(acc_s)

    in_bounds = k_start <= q_start + q_tile - 1     # tile not fully above the diagonal
    crossing = k_start + kv_tile - 1 > q_start      # tile crosses the diagonal

    def _update(apply_mask):
        k = k_ref[0]                                 # (TK, C) compute dtype
        v = v_ref[0]                                 # (TK, C)
        if apply_mask:
            row = q_start + lax.broadcasted_iota(jnp.int32, (q_tile, kv_tile), 0)
            col = k_start + lax.broadcasted_iota(jnp.int32, (q_tile, kv_tile), 1)
            mask = row >= col
        for h in range(n_head):
            sl = slice(h * head_dim, (h + 1) * head_dim)
            # q_h @ k_h^T without materializing the transpose.
            s = lax.dot_general(q_scr[:, sl], k[:, sl],
                                (((1,), (1,)), ((), ())),
                                preferred_element_type=jnp.float32)
            if apply_mask:
                s = jnp.where(mask, s, NEG_INF)
            m_prev = m_s[:, h:h + 1]
            m_new = jnp.maximum(m_prev, jnp.max(s, axis=-1, keepdims=True))
            alpha = jnp.exp(m_prev - m_new)
            p = jnp.exp(s - m_new)
            l_s[:, h:h + 1] = alpha * l_s[:, h:h + 1] + jnp.sum(p, axis=-1, keepdims=True)
            acc_s[:, sl] = alpha * acc_s[:, sl] + jnp.dot(
                p.astype(v.dtype), v[:, sl], preferred_element_type=jnp.float32)
            m_s[:, h:h + 1] = m_new

    @pl.when(jnp.logical_and(in_bounds, crossing))
    def _masked():
        _update(True)

    @pl.when(jnp.logical_and(in_bounds, jnp.logical_not(crossing)))
    def _unmasked():
        _update(False)

    @pl.when(ki == n_k - 1)
    def _finalize():
        # Deferred normalization, then a single lane-dense (TQ, C) store.
        for h in range(n_head):
            sl = slice(h * head_dim, (h + 1) * head_dim)
            inv = pl.reciprocal(l_s[:, h:h + 1], approx=approx_recip)
            acc_s[:, sl] = acc_s[:, sl] * inv
        o_ref[0] = acc_s[...].astype(o_ref.dtype)


# ------------- kernel 3: attn proj + residual + LN2 + chunked MLP ------------
def _proj_mlp_kernel(x_ref, y_ref,
                     wproj_ref, bproj_ref, ln2w_ref, ln2b_ref,
                     wfc_ref, bfc_ref, wmp_ref, bmp_ref,
                     o_ref, xn2_s, acc_s):
    hc = pl.program_id(2)
    n_hc = pl.num_programs(2)

    @pl.when(hc == 0)
    def _init():
        # attention output projection + first residual (biases added once)
        attn = jnp.dot(y_ref[0], wproj_ref[...],
                       preferred_element_type=jnp.float32) + bproj_ref[...]
        x1 = x_ref[0].astype(jnp.float32) + attn
        xn2_s[...] = _layer_norm_f32(x1, ln2w_ref[...], ln2b_ref[...]).astype(xn2_s.dtype)
        acc_s[...] = x1 + bmp_ref[...]        # accumulator starts at residual + final bias

    # one 4C-hidden chunk of the MLP per grid step
    h = jnp.dot(xn2_s[...], wfc_ref[...],
                preferred_element_type=jnp.float32) + bfc_ref[...]
    h = _gelu_tanh(h)
    acc_s[...] += jnp.dot(h.astype(wmp_ref.dtype), wmp_ref[...],
                          preferred_element_type=jnp.float32)

    @pl.when(hc == n_hc - 1)
    def _finalize():
        o_ref[0] = acc_s[...].astype(o_ref.dtype)


# --------------------------------- wrapper -----------------------------------
def _block_forward_impl(x, params, *, n_head, compute_dtype, q_tile, kv_tile,
                        hidden_chunk, approx_recip):
    B, T, C = x.shape
    head_dim = C // n_head
    H = 4 * C
    cd = jnp.dtype(compute_dtype)

    f32p = lambda k: params[k].astype(jnp.float32)
    ln1_w, ln1_b = f32p("ln1_w"), f32p("ln1_b")
    ln2_w, ln2_b = f32p("ln2_w"), f32p("ln2_b")
    b_qkv, b_attn_proj = f32p("b_qkv"), f32p("b_attn_proj")
    b_fc, b_mlp_proj = f32p("b_fc"), f32p("b_mlp_proj")
    # matmul operands (weights) in compute dtype; accumulation stays f32
    w_qkv = params["w_qkv"].astype(cd)
    w_attn_proj = params["w_attn_proj"].astype(cd)
    w_fc = params["w_fc"].astype(cd)
    w_mlp_proj = params["w_mlp_proj"].astype(cd)

    t_tile = q_tile
    n_t, n_q, n_k, n_h = T // t_tile, T // q_tile, T // kv_tile, H // hidden_chunk
    vmem_limit = _vmem_limit_bytes()
    cparams2 = pltpu.CompilerParams(
        dimension_semantics=("parallel", "parallel"),
        vmem_limit_bytes=vmem_limit)
    cparams3 = pltpu.CompilerParams(
        dimension_semantics=("parallel", "parallel", "arbitrary"),
        vmem_limit_bytes=vmem_limit)

    # ---- 1) LayerNorm1 + fused QKV projection ------------------------------
    qkv = pl.pallas_call(
        _ln_qkv_kernel,
        out_shape=jax.ShapeDtypeStruct((B, T, 3 * C), cd),
        grid_spec=pltpu.PrefetchScalarGridSpec(
            num_scalar_prefetch=0,
            grid=(B, n_t),
            in_specs=[
                pl.BlockSpec((1, t_tile, C), lambda b, t: (b, t, 0)),
                pl.BlockSpec((1, C), lambda b, t: (0, 0)),
                pl.BlockSpec((1, C), lambda b, t: (0, 0)),
                pl.BlockSpec((C, 3 * C), lambda b, t: (0, 0)),
                pl.BlockSpec((1, 3 * C), lambda b, t: (0, 0)),
            ],
            out_specs=pl.BlockSpec((1, t_tile, 3 * C), lambda b, t: (b, t, 0)),
        ),
        compiler_params=cparams2,
    )(x, ln1_w, ln1_b, w_qkv, b_qkv)

    # ---- 2) flash causal attention (reads packed qkv, writes (B, T, C)) -----
    def _kv_index(block_k):
        # Causal clamp: fully-masked KV tiles reuse the previous block index
        # (no DMA), last-axis block index selects the Q/K/V third of (B,T,3C).
        def im(b, qi, ki):
            last_ok = (qi * q_tile + (q_tile - 1)) // kv_tile
            return (b, jnp.minimum(ki, last_ok), block_k)
        return im

    flash = functools.partial(
        _flash_attn_kernel, n_head=n_head, head_dim=head_dim,
        q_tile=q_tile, kv_tile=kv_tile, scale=1.0 / math.sqrt(head_dim),
        approx_recip=approx_recip)
    y = pl.pallas_call(
        flash,
        out_shape=jax.ShapeDtypeStruct((B, T, C), cd),
        grid_spec=pltpu.PrefetchScalarGridSpec(
            num_scalar_prefetch=0,
            grid=(B, n_q, n_k),
            in_specs=[
                pl.BlockSpec((1, q_tile, C), lambda b, qi, ki: (b, qi, 0)),   # Q third
                pl.BlockSpec((1, kv_tile, C), _kv_index(1)),                   # K third
                pl.BlockSpec((1, kv_tile, C), _kv_index(2)),                   # V third
            ],
            out_specs=pl.BlockSpec((1, q_tile, C), lambda b, qi, ki: (b, qi, 0)),
            scratch_shapes=[
                pltpu.VMEM((q_tile, C), cd),                  # pre-scaled q
                pltpu.VMEM((q_tile, n_head), jnp.float32),    # running max (per head)
                pltpu.VMEM((q_tile, n_head), jnp.float32),    # running sum (per head)
                pltpu.VMEM((q_tile, C), jnp.float32),         # output accumulator
            ],
        ),
        compiler_params=cparams3,
    )(qkv, qkv, qkv)

    # ---- 3) attn out-proj + residual + LN2 + chunked MLP + residual ---------
    out = pl.pallas_call(
        _proj_mlp_kernel,
        out_shape=jax.ShapeDtypeStruct((B, T, C), x.dtype),
        grid_spec=pltpu.PrefetchScalarGridSpec(
            num_scalar_prefetch=0,
            grid=(B, n_t, n_h),
            in_specs=[
                pl.BlockSpec((1, t_tile, C), lambda b, t, h: (b, t, 0)),   # x (residual)
                pl.BlockSpec((1, t_tile, C), lambda b, t, h: (b, t, 0)),   # attention y
                pl.BlockSpec((C, C), lambda b, t, h: (0, 0)),              # w_attn_proj
                pl.BlockSpec((1, C), lambda b, t, h: (0, 0)),              # b_attn_proj
                pl.BlockSpec((1, C), lambda b, t, h: (0, 0)),              # ln2_w
                pl.BlockSpec((1, C), lambda b, t, h: (0, 0)),              # ln2_b
                pl.BlockSpec((C, hidden_chunk), lambda b, t, h: (0, h)),   # w_fc chunk
                pl.BlockSpec((1, hidden_chunk), lambda b, t, h: (0, h)),   # b_fc chunk
                pl.BlockSpec((hidden_chunk, C), lambda b, t, h: (h, 0)),   # w_mlp_proj chunk
                pl.BlockSpec((1, C), lambda b, t, h: (0, 0)),              # b_mlp_proj
            ],
            out_specs=pl.BlockSpec((1, t_tile, C), lambda b, t, h: (b, t, 0)),
            scratch_shapes=[
                pltpu.VMEM((t_tile, C), cd),            # LN2(x1), matmul operand
                pltpu.VMEM((t_tile, C), jnp.float32),   # residual + MLP accumulator
            ],
        ),
        compiler_params=cparams3,
    )(x, y, w_attn_proj, b_attn_proj, ln2_w, ln2_b, w_fc, b_fc, w_mlp_proj, b_mlp_proj)

    return out


def block_forward(x, params, *, n_head, compute_dtype=jnp.bfloat16,
                  q_tile=None, kv_tile=None, hidden_chunk=None, approx_recip=None):
    """Forward pass of the nanoGPT Block. `approx_recip=None` -> EUP approximate
    reciprocal is used for the softmax denominator only when compute_dtype != f32."""
    B, T, C = x.shape
    assert C % n_head == 0
    cd = jnp.dtype(compute_dtype)
    # bf16 vregs pack 16 sublanes -> prefer multiple-of-16 seq tiles in bf16 mode.
    step = 16 if cd == jnp.dtype(jnp.bfloat16) else 8
    if q_tile is None:
        q_tile = _largest_tile(T, 512, step)
    if kv_tile is None:
        kv_tile = _largest_tile(T, 512, step)
    if hidden_chunk is None:
        hidden_chunk = _largest_tile(4 * C, 2048, 128)
    assert T % q_tile == 0 and T % kv_tile == 0 and (4 * C) % hidden_chunk == 0
    if approx_recip is None:
        approx_recip = cd != jnp.dtype(jnp.float32)

    return _block_forward_impl(
        x, params, n_head=n_head, compute_dtype=compute_dtype, q_tile=q_tile,
        kv_tile=kv_tile, hidden_chunk=hidden_chunk, approx_recip=approx_recip)


# ---------------- pure-JAX reference (for correctness check) ----------------
def block_reference(x, params, *, n_head):
    B, T, C = x.shape
    hd = C // n_head

    def ln(v, w, b):
        mu = jnp.mean(v, axis=-1, keepdims=True)
        var = jnp.mean((v - mu) ** 2, axis=-1, keepdims=True)
        return (v - mu) * lax.rsqrt(var + LN_EPS) * w + b

    x_ln1 = ln(x, params["ln1_w"], params["ln1_b"])
    qkv = x_ln1 @ params["w_qkv"] + params["b_qkv"]
    q, k, v = jnp.split(qkv, 3, axis=-1)
    q = q.reshape(B, T, n_head, hd).transpose(0, 2, 1, 3)
    k = k.reshape(B, T, n_head, hd).transpose(0, 2, 1, 3)
    v = v.reshape(B, T, n_head, hd).transpose(0, 2, 1, 3)
    s = jnp.einsum("bhqd,bhkd->bhqk", q, k) / math.sqrt(hd)
    mask = jnp.tril(jnp.ones((T, T), dtype=bool))
    s = jnp.where(mask, s, -jnp.inf)
    p = jax.nn.softmax(s, axis=-1)
    y = jnp.einsum("bhqk,bhkd->bhqd", p, v).transpose(0, 2, 1, 3).reshape(B, T, C)
    x1 = x + (y @ params["w_attn_proj"] + params["b_attn_proj"])

    x_ln2 = ln(x1, params["ln2_w"], params["ln2_b"])
    h = x_ln2 @ params["w_fc"] + params["b_fc"]
    h = 0.5 * h * (1.0 + jnp.tanh(0.7978845608028654 * (h + 0.044715 * h ** 3)))
    return x1 + (h @ params["w_mlp_proj"] + params["b_mlp_proj"])


if __name__ == "__main__":
    # Small config exercising all tiling paths:
    # 2 query tiles x 2 kv tiles (causal DMA clamp + compute skip, crossing and
    # non-crossing mask branches), 2 MLP hidden chunks, 4 heads.
    B, T, C, n_head = 2, 128, 128, 4
    Q_TILE, KV_TILE, HIDDEN_CHUNK = 64, 64, 256

    key = jax.random.PRNGKey(0)
    ks = jax.random.split(key, 12)

    params = {
        "ln1_w": 1.0 + 0.1 * jax.random.normal(ks[9], (1, C), jnp.float32),
        "ln1_b": 0.05 * jax.random.normal(ks[10], (1, C), jnp.float32),
        "w_qkv": 0.02 * jax.random.normal(ks[0], (C, 3 * C), jnp.float32),
        "b_qkv": 0.01 * jax.random.normal(ks[1], (1, 3 * C), jnp.float32),
        "w_attn_proj": 0.02 * jax.random.normal(ks[2], (C, C), jnp.float32),
        "b_attn_proj": 0.01 * jax.random.normal(ks[3], (1, C), jnp.float32),
        "ln2_w": 1.0 + 0.1 * jax.random.normal(ks[11], (1, C), jnp.float32),
        "ln2_b": jnp.zeros((1, C), jnp.float32),
        "w_fc": 0.02 * jax.random.normal(ks[4], (C, 4 * C), jnp.float32),
        "b_fc": 0.01 * jax.random.normal(ks[5], (1, 4 * C), jnp.float32),
        "w_mlp_proj": 0.02 * jax.random.normal(ks[6], (4 * C, C), jnp.float32),
        "b_mlp_proj": 0.01 * jax.random.normal(ks[7], (1, C), jnp.float32),
    }
    x = jax.random.normal(ks[8], (B, T, C), jnp.float32)

    ref = jax.block_until_ready(block_reference(x, params, n_head=n_head))

    # Exact-precision mode (f32 MXU operands, exact reciprocal): tight check.
    out_f32 = jax.block_until_ready(
        block_forward(x, params, n_head=n_head, compute_dtype=jnp.float32,
                      q_tile=Q_TILE, kv_tile=KV_TILE, hidden_chunk=HIDDEN_CHUNK))
    assert out_f32.shape == (B, T, C)
    assert out_f32.dtype == x.dtype
    assert jnp.allclose(out_f32, ref, atol=3e-4, rtol=3e-4), "f32 kernel mismatch vs reference"

    # Performance mode (bf16 MXU operands, f32 accumulation): looser check.
    out_bf16 = jax.block_until_ready(
        block_forward(x, params, n_head=n_head, compute_dtype=jnp.bfloat16,
                      q_tile=Q_TILE, kv_tile=KV_TILE, hidden_chunk=HIDDEN_CHUNK))
    assert out_bf16.shape == (B, T, C)
    assert out_bf16.dtype == x.dtype
    assert jnp.allclose(out_bf16, ref, atol=3e-2, rtol=3e-2), "bf16 kernel mismatch vs reference"

    print("KERNEL_OK")
</pallas_src>

<mosaic_0001>
module attributes {stable_mosaic.version = 11 : i64} {
  func.func @_ln_qkv_kernel(%arg0: i32, %arg1: i32, %arg2: memref<1x64x128xf32, #tpu.memory_space<vmem>>, %arg3: memref<1x128xf32, #tpu.memory_space<vmem>>, %arg4: memref<1x128xf32, #tpu.memory_space<vmem>>, %arg5: memref<128x384xf32, #tpu.memory_space<vmem>>, %arg6: memref<1x384xf32, #tpu.memory_space<vmem>>, %arg7: memref<1x64x384xf32, #tpu.memory_space<vmem>>) attributes {dimension_semantics = [#tpu.dimension_semantics<parallel>, #tpu.dimension_semantics<parallel>], iteration_bounds = array<i64: 2, 2>, scalar_prefetch = 0 : i64, scratch_operands = 0 : i64, tpu.core_type = #tpu.core_type<tc>, window_params = [{transform_indices = @transform_0, window_bounds = array<i64: 1, 64, 128>}, {pipeline_mode = #tpu.pipeline_mode<synchronous>, transform_indices = @transform_1, window_bounds = array<i64: 1, 128>}, {pipeline_mode = #tpu.pipeline_mode<synchronous>, transform_indices = @transform_2, window_bounds = array<i64: 1, 128>}, {pipeline_mode = #tpu.pipeline_mode<synchronous>, transform_indices = @transform_3, window_bounds = array<i64: 128, 384>}, {pipeline_mode = #tpu.pipeline_mode<synchronous>, transform_indices = @transform_4, window_bounds = array<i64: 1, 384>}, {transform_indices = @transform_5, window_bounds = array<i64: 1, 64, 384>}]} {
    %c0 = arith.constant 0 : index
    %c0_0 = arith.constant 0 : index
    %c0_1 = arith.constant 0 : index
    %0 = vector.load %arg2[%c0, %c0_0, %c0_1] : memref<1x64x128xf32, #tpu.memory_space<vmem>>, vector<1x64x128xf32>
    %1 = vector.shape_cast %0 : vector<1x64x128xf32> to vector<64x128xf32>
    %c0_2 = arith.constant 0 : index
    %c0_3 = arith.constant 0 : index
    %2 = vector.load %arg3[%c0_2, %c0_3] : memref<1x128xf32, #tpu.memory_space<vmem>>, vector<1x128xf32>
    %c0_4 = arith.constant 0 : index
    %c0_5 = arith.constant 0 : index
    %3 = vector.load %arg4[%c0_4, %c0_5] : memref<1x128xf32, #tpu.memory_space<vmem>>, vector<1x128xf32>
    %cst = arith.constant dense<0.000000e+00> : vector<64xf32>
    %4 = vector.multi_reduction <add>, %1, %cst [1] : vector<64x128xf32> to vector<64xf32>
    %5 = vector.shape_cast %4 : vector<64xf32> to vector<64x1xf32>
    %cst_6 = arith.constant 1.280000e+02 : f32
    %6 = vector.broadcast %cst_6 : f32 to vector<64x1xf32>
    %7 = arith.divf %5, %6 : vector<64x1xf32>
    %8 = vector.broadcast %7 : vector<64x1xf32> to vector<64x128xf32>
    %9 = arith.subf %1, %8 : vector<64x128xf32>
    %10 = arith.mulf %9, %9 : vector<64x128xf32>
    %cst_7 = arith.constant dense<0.000000e+00> : vector<64xf32>
    %11 = vector.multi_reduction <add>, %10, %cst_7 [1] : vector<64x128xf32> to vector<64xf32>
    %12 = vector.shape_cast %11 : vector<64xf32> to vector<64x1xf32>
    %cst_8 = arith.constant 1.280000e+02 : f32
    %13 = vector.broadcast %cst_8 : f32 to vector<64x1xf32>
    %14 = arith.divf %12, %13 : vector<64x1xf32>
    %15 = vector.broadcast %7 : vector<64x1xf32> to vector<64x128xf32>
    %16 = arith.subf %1, %15 : vector<64x128xf32>
    %cst_9 = arith.constant 9.99999974E-6 : f32
    %17 = vector.broadcast %cst_9 : f32 to vector<64x1xf32>
    %18 = arith.addf %14, %17 : vector<64x1xf32>
    %19 = math.rsqrt %18 : vector<64x1xf32>
    %20 = vector.broadcast %19 : vector<64x1xf32> to vector<64x128xf32>
    %21 = arith.mulf %16, %20 : vector<64x128xf32>
    %22 = vector.broadcast %2 : vector<1x128xf32> to vector<64x128xf32>
    %23 = arith.mulf %21, %22 : vector<64x128xf32>
    %24 = vector.broadcast %3 : vector<1x128xf32> to vector<64x128xf32>
    %25 = arith.addf %23, %24 : vector<64x128xf32>
    %c0_10 = arith.constant 0 : index
    %c0_11 = arith.constant 0 : index
    %26 = vector.load %arg5[%c0_10, %c0_11] : memref<128x384xf32, #tpu.memory_space<vmem>>, vector<128x384xf32>
    %cst_12 = arith.constant dense<0.000000e+00> : vector<64x384xf32>
    %27 = tpu.matmul %25, %26, %cst_12 {dimension_numbers = #tpu.dot_dimension_numbers<[1], [0], [0], [1], [0, 0, 1, 1], [], []>} : vector<64x128xf32>, vector<128x384xf32>, vector<64x384xf32> -> vector<64x384xf32>
    %c0_13 = arith.constant 0 : index
    %c0_14 = arith.constant 0 : index
    %28 = vector.load %arg6[%c0_13, %c0_14] : memref<1x384xf32, #tpu.memory_space<vmem>>, vector<1x384xf32>
    %29 = vector.broadcast %28 : vector<1x384xf32> to vector<64x384xf32>
    %30 = arith.addf %27, %29 : vector<64x384xf32>
    %c0_15 = arith.constant 0 : index
    %c0_16 = arith.constant 0 : index
    %c0_17 = arith.constant 0 : index
    %31 = vector.load %arg7[%c0_15, %c0_16, %c0_17] : memref<1x64x384xf32, #tpu.memory_space<vmem>>, vector<1x64x384xf32>
    %32 = vector.shape_cast %31 : vector<1x64x384xf32> to vector<64x384xf32>
    %33 = vector.shape_cast %30 : vector<64x384xf32> to vector<1x64x384xf32>
    tpu.vector_store %arg7[%c0_15, %c0_16, %c0_17], %33 {strides = array<i32>} : memref<1x64x384xf32, #tpu.memory_space<vmem>>, vector<1x64x384xf32>,
    return
  }
  func.func @transform_0(%arg0: i32, %arg1: i32) -> (i32, i32, i32) {
    %c0_i32 = arith.constant 0 : i32
    %c0_i32_0 = arith.constant 0 : i32
    return %arg0, %arg1, %c0_i32 : i32, i32, i32
  }
  func.func @transform_1(%arg0: i32, %arg1: i32) -> (i32, i32) {
    %c0_i32 = arith.constant 0 : i32
    %c0_i32_0 = arith.constant 0 : i32
    %c0_i32_1 = arith.constant 0 : i32
    return %c0_i32, %c0_i32_0 : i32, i32
  }
  func.func @transform_2(%arg0: i32, %arg1: i32) -> (i32, i32) {
    %c0_i32 = arith.constant 0 : i32
    %c0_i32_0 = arith.constant 0 : i32
    %c0_i32_1 = arith.constant 0 : i32
    return %c0_i32, %c0_i32_0 : i32, i32
  }
  func.func @transform_3(%arg0: i32, %arg1: i32) -> (i32, i32) {
    %c0_i32 = arith.constant 0 : i32
    %c0_i32_0 = arith.constant 0 : i32
    %c0_i32_1 = arith.constant 0 : i32
    return %c0_i32, %c0_i32_0 : i32, i32
  }
  func.func @transform_4(%arg0: i32, %arg1: i32) -> (i32, i32) {
    %c0_i32 = arith.constant 0 : i32
    %c0_i32_0 = arith.constant 0 : i32
    %c0_i32_1 = arith.constant 0 : i32
    return %c0_i32, %c0_i32_0 : i32, i32
  }
  func.func @transform_5(%arg0: i32, %arg1: i32) -> (i32, i32, i32) {
    %c0_i32 = arith.constant 0 : i32
    %c0_i32_0 = arith.constant 0 : i32
    return %arg0, %arg1, %c0_i32 : i32, i32, i32
  }
}

</mosaic_0001>

<llo_original>
// kernel: tpu_custom_call.1
$region0: #{tpu_custom_call.1}
  #allocation0 [shape = 'u32[]', space=smem, size = 0x4, offset = 0x4, fixed_abs, tag = 'smem constant byte address 0x4 - core index']
  #allocation1 [shape = 'u32[144,128]{1,0:T(1,128)}', space=vmem, size = 0x12000, scoped, tag = 'internal scratch']
  %s0 = inlined_call_operand.hbm [shape: f32[2,128,128], index: 0, kind: input, shape index: {}]
  %s1 = inlined_call_operand.hbm [shape: f32[1,128], index: 1, kind: input, shape index: {}]
  %s2 = inlined_call_operand.hbm [shape: f32[1,128], index: 2, kind: input, shape index: {}]
  %s3 = inlined_call_operand.hbm [shape: f32[128,384], index: 3, kind: input, shape index: {}]
  %s4 = inlined_call_operand.hbm [shape: f32[1,384], index: 4, kind: input, shape index: {}]
  %s5 = inlined_call_operand.hbm [shape: f32[2,128,384], index: 5, kind: output, shape index: {}]
  %s6 = sld [smem:[#allocation0]]
  $region73: #{tpu_custom_call.1} parent=0
    _
  %s8 = ssub.s32 1, %s6
  %s9 = scalar_select 0, %s8, %s6
  $region1: #{tpu_custom_call.1} parent=0
    #allocation2 [shape = 'u8[65536]{0}', space=vmem, size = 0x10000, scoped, tag = 'input window, operand 0']
    #allocation3 [shape = 's32[2]{0}', space=sflag, size = 0x8, scoped, tag = 'scoped memory for tpu_custom_call.1']
    #allocation4 [shape = 's32[2]{0}', space=sflag, size = 0x8, scoped, tag = 'scoped memory for tpu_custom_call.1']
    #allocation5 [shape = 'u8[512]{0}', space=vmem, size = 0x400, scoped, tag = 'input window, operand 1, single buffered']
    #allocation6 [shape = 's32[1]{0}', space=sflag, size = 0x4, scoped, tag = 'scoped memory for tpu_custom_call.1']
    #allocation7 [shape = 'u8[512]{0}', space=vmem, size = 0x400, scoped, tag = 'input window, operand 2, single buffered']
    #allocation8 [shape = 'u8[196608]{0}', space=vmem, size = 0x30000, scoped, tag = 'input window, operand 3, single buffered']
    #allocation9 [shape = 's32[1]{0}', space=sflag, size = 0x4, scoped, tag = 'scoped memory for tpu_custom_call.1']
    #allocation10 [shape = 'u8[1536]{0}', space=vmem, size = 0x800, scoped, tag = 'input window, operand 4, single buffered']
    #allocation11 [shape = 'u8[196608]{0}', space=vmem, size = 0x30000, scoped, tag = 'output window, operand 0']
    %10 = vsyncpa [#allocation3], 0
    %s11 = scalar_lea.sflag [#allocation3], 1
    %12 = vsyncpa %s11, 0
    %13 = vsyncpa [#allocation6], 0
    %14 = vsyncpa [#allocation9], 0
    %15 = vsyncpa [#allocation4], 0
    %s16 = scalar_lea.sflag [#allocation4], 1
    %17 = vsyncpa %s16, 0
    loop: start=0, step=1, limit=6
    $region2: #{tpu_custom_call.1} parent=1 // loop_pre_header
      _
    $region3: #{tpu_custom_call.1} parent=1 // loop_header
      %s19 = sphi 0, %s23
      %p20 = scmp.ge.s32.totalorder %s19, 6
      %s26 = sphi 0, %s38
      %s27 = sphi 0, %s34
      %s28 = sphi 0, %s26
      %s29 = sphi 0, %s27
      %s30 = sphi 0, %s28
      %s31 = sphi 0, %s29
      %s43 = sphi 0, %s45
      %s46 = sphi 0, %s43
      %s47 = sphi 0, %s46
      %s63 = sphi 0, %s47
      %s67 = sphi 0, %s67
      %s69 = sphi 0, %s67
      %s70 = sphi 0, %s69
      %s84 = sphi 0, %s70
      %s88 = sphi 0, %s88
      %s90 = sphi 0, %s88
      %s91 = sphi 0, %s90
      %s105 = sphi 0, %s91
      %s109 = sphi 0, %s109
      %s111 = sphi 0, %s109
      %s112 = sphi 0, %s111
      %s126 = sphi 0, %s112
      %s130 = sphi 0, %s130
      %s132 = sphi 0, %s130
      %s133 = sphi 0, %s132
      %s147 = sphi 0, %s133
      %s155 = sphi 0, %s157
      %s158 = sphi 0, %s155
      %s159 = sphi 0, %s158
      %s175 = sphi 0, %s159
    $region4: #{tpu_custom_call.1} parent=1 // loop_header_branch
      %22 = sbr.rel (%p20) target = $region8
    $region5: #{tpu_custom_call.1} parent=1 // loop_body
      %s24 = ssub.s32 %s19, 1
      %s25 = ssub.s32 %s19, 2
      %s32 = sadd.s32 1, %s27
      %p33 = scmp.ge.s32.totalorder %s32, 2
      %s34 = scalar_select %p33, 0, %s32
      %s35 = sadd.s32 1, %s26
      %s36 = scalar_select %p33, %s35, %s26
      %p37 = scmp.ge.s32.totalorder %s36, 2
      %s38 = scalar_select %p37, 0, %s36
      %s39 = ssub.s32 %s26, %s38
      %s40 = ssub.s32 %s27, %s34
      %s41 = sor.u32 %s39, %s40
      %p42 = scmp.eq.s32.totalorder %s41, 0
      %s44 = sadd.s32 %s43, 1
      %s45 = scalar_select %p42, %s43, %s44
      %p48 = pneg %p42
      %p49 = scmp.eq.s32.totalorder %s19, 3
      %p50 = por %p48, %p49
      %p51 = scmp.ne.s32.totalorder %s43, %s46
      %p52 = scmp.eq.s32.totalorder %s19, 0
      %p53 = por %p51, %p52
      %p54 = scmp.ne.s32.totalorder %s43, %s46
      %p55 = scmp.eq.s32.totalorder %s24, 3
      %p56 = por %p54, %p55
      %p57 = scmp.ne.s32.totalorder %s46, %s47
      %p58 = scmp.eq.s32.totalorder %s24, 0
      %p59 = por %p57, %p58
      %p60 = scmp.ne.s32.totalorder %s46, %s47
      %p61 = scmp.eq.s32.totalorder %s25, 3
      %p62 = por %p60, %p61
      %p64 = scmp.ne.s32.totalorder %s47, %s63
      %p65 = scmp.eq.s32.totalorder %s25, 0
      %p66 = por %p64, %p65
      %s68 = sadd.s32 %s67, 1
      %p71 = scmp.eq.s32.totalorder %s19, 3
      %p72 = scmp.ne.s32.totalorder %s67, %s69
      %p73 = scmp.eq.s32.totalorder %s19, 0
      %p74 = por %p72, %p73
      %p75 = scmp.ne.s32.totalorder %s67, %s69
      %p76 = scmp.eq.s32.totalorder %s24, 3
      %p77 = por %p75, %p76
      %p78 = scmp.ne.s32.totalorder %s69, %s70
      %p79 = scmp.eq.s32.totalorder %s24, 0
      %p80 = por %p78, %p79
      %p81 = scmp.ne.s32.totalorder %s69, %s70
      %p82 = scmp.eq.s32.totalorder %s25, 3
      %p83 = por %p81, %p82
      %p85 = scmp.ne.s32.totalorder %s70, %s84
      %p86 = scmp.eq.s32.totalorder %s25, 0
      %p87 = por %p85, %p86
      %s89 = sadd.s32 %s88, 1
      %p92 = scmp.eq.s32.totalorder %s19, 3
      %p93 = scmp.ne.s32.totalorder %s88, %s90
      %p94 = scmp.eq.s32.totalorder %s19, 0
      %p95 = por %p93, %p94
      %p96 = scmp.ne.s32.totalorder %s88, %s90
      %p97 = scmp.eq.s32.totalorder %s24, 3
      %p98 = por %p96, %p97
      %p99 = scmp.ne.s32.totalorder %s90, %s91
      %p100 = scmp.eq.s32.totalorder %s24, 0
      %p101 = por %p99, %p100
      %p102 = scmp.ne.s32.totalorder %s90, %s91
      %p103 = scmp.eq.s32.totalorder %s25, 3
      %p104 = por %p102, %p103
      %p106 = scmp.ne.s32.totalorder %s91, %s105
      %p107 = scmp.eq.s32.totalorder %s25, 0
      %p108 = por %p106, %p107
      %s110 = sadd.s32 %s109, 1
      %p113 = scmp.eq.s32.totalorder %s19, 3
      %p114 = scmp.ne.s32.totalorder %s109, %s111
      %p115 = scmp.eq.s32.totalorder %s19, 0
      %p116 = por %p114, %p115
      %p117 = scmp.ne.s32.totalorder %s109, %s111
      %p118 = scmp.eq.s32.totalorder %s24, 3
      %p119 = por %p117, %p118
      %p120 = scmp.ne.s32.totalorder %s111, %s112
      %p121 = scmp.eq.s32.totalorder %s24, 0
      %p122 = por %p120, %p121
      %p123 = scmp.ne.s32.totalorder %s111, %s112
      %p124 = scmp.eq.s32.totalorder %s25, 3
      %p125 = por %p123, %p124
      %p127 = scmp.ne.s32.totalorder %s112, %s126
      %p128 = scmp.eq.s32.totalorder %s25, 0
      %p129 = por %p127, %p128
      %s131 = sadd.s32 %s130, 1
      %p134 = scmp.eq.s32.totalorder %s19, 3
      %p135 = scmp.ne.s32.totalorder %s130, %s132
      %p136 = scmp.eq.s32.totalorder %s19, 0
      %p137 = por %p135, %p136
      %p138 = scmp.ne.s32.totalorder %s130, %s132
      %p139 = scmp.eq.s32.totalorder %s24, 3
      %p140 = por %p138, %p139
      %p141 = scmp.ne.s32.totalorder %s132, %s133
      %p142 = scmp.eq.s32.totalorder %s24, 0
      %p143 = por %p141, %p142
      %p144 = scmp.ne.s32.totalorder %s132, %s133
      %p145 = scmp.eq.s32.totalorder %s25, 3
      %p146 = por %p144, %p145
      %p148 = scmp.ne.s32.totalorder %s133, %s147
      %p149 = scmp.eq.s32.totalorder %s25, 0
      %p150 = por %p148, %p149
      %s151 = ssub.s32 %s26, %s38
      %s152 = ssub.s32 %s27, %s34
      %s153 = sor.u32 %s151, %s152
      %p154 = scmp.eq.s32.totalorder %s153, 0
      %s156 = sadd.s32 %s155, 1
      %s157 = scalar_select %p154, %s155, %s156
      %p160 = pneg %p154
      %p161 = scmp.eq.s32.totalorder %s19, 3
      %p162 = por %p160, %p161
      %p163 = scmp.ne.s32.totalorder %s155, %s158
      %p164 = scmp.eq.s32.totalorder %s19, 0
      %p165 = por %p163, %p164
      %p166 = scmp.ne.s32.totalorder %s155, %s158
      %p167 = scmp.eq.s32.totalorder %s24, 3
      %p168 = por %p166, %p167
      %p169 = scmp.ne.s32.totalorder %s158, %s159
      %p170 = scmp.eq.s32.totalorder %s24, 0
      %p171 = por %p169, %p170
      %p172 = scmp.ne.s32.totalorder %s158, %s159
      %p173 = scmp.eq.s32.totalorder %s25, 3
      %p174 = por %p172, %p173
      %p176 = scmp.ne.s32.totalorder %s159, %s175
      %p177 = scmp.eq.s32.totalorder %s25, 0
      %p178 = por %p176, %p177
      %p179 = scmp.le.s32.totalorder 1, %s19
      %p180 = scmp.lt.s32.totalorder %s19, 5
      %p181 = pnand %p179, %p180
      %p182 = pneg %p181
      // Predicated region
      $region9: #{tpu_custom_call.1} parent=5 // pred_check
        _
      $region10: #{tpu_custom_call.1} parent=5 // pred_check_branch
        %184 = sbr.rel (%p181) target = $region12
      $region11: #{tpu_custom_call.1} parent=5 // pred_region
        %s185 = ssub.s32 %s19, 1
        // Predicated region
        $region13: #{tpu_custom_call.1} parent=11 // pred_check
          %p186 = pneg %p80
        $region14: #{tpu_custom_call.1} parent=11 // pred_check_branch
          %188 = sbr.rel (%p186) target = $region16
        $region15: #{tpu_custom_call.1} parent=11 // pred_region
          %s190 = ssub.s32 16, 16
          %191 = vsyncadd [#allocation6], %s190
          %s193 = sshll.u32 [#allocation5], 4
          %s194 = int_to_ptr.vmem [resolvable:$true] %s193
          %196 = dma.hbm_to_vmem [thread:$0]  %s1, 16, %s194, [#allocation6]
        $region16: #{tpu_custom_call.1} parent=11 // pred_fallthru
          _
        // Predicated region
        $region17: #{tpu_custom_call.1} parent=11 // pred_check
          %p197 = pneg %p101
        $region18: #{tpu_custom_call.1} parent=11 // pred_check_branch
          %199 = sbr.rel (%p197) target = $region20
        $region19: #{tpu_custom_call.1} parent=11 // pred_region
          %s201 = ssub.s32 16, 16
          %202 = vsyncadd [#allocation6], %s201
          %s204 = sshll.u32 [#allocation7], 4
          %s205 = int_to_ptr.vmem [resolvable:$true] %s204
          %207 = dma.hbm_to_vmem [thread:$0]  %s2, 16, %s205, [#allocation6]
        $region20: #{tpu_custom_call.1} parent=11 // pred_fallthru
          _
        // Predicated region
        $region21: #{tpu_custom_call.1} parent=11 // pred_check
          %p208 = pneg %p122
        $region22: #{tpu_custom_call.1} parent=11 // pred_check_branch
          %210 = sbr.rel (%p208) target = $region24
        $region23: #{tpu_custom_call.1} parent=11 // pred_region
          %s212 = ssub.s32 6144, 6144
          %213 = vsyncadd [#allocation9], %s212
          %s214 = sshll.u32 [#allocation8], 4
          %s215 = int_to_ptr.vmem [resolvable:$true] %s214
          %220 = dma.hbm_to_vmem [thread:$0]  %s3, 6144, %s215, [#allocation9], 384, 384, 24
        $region24: #{tpu_custom_call.1} parent=11 // pred_fallthru
          _
        // Predicated region
        $region25: #{tpu_custom_call.1} parent=11 // pred_check
          %p221 = pneg %p143
        $region26: #{tpu_custom_call.1} parent=11 // pred_check_branch
          %223 = sbr.rel (%p221) target = $region28
        $region27: #{tpu_custom_call.1} parent=11 // pred_region
          %s225 = ssub.s32 48, 48
          %226 = vsyncadd [#allocation9], %s225
          %s228 = sshll.u32 [#allocation10], 4
          %s229 = int_to_ptr.vmem [resolvable:$true] %s228
          %231 = dma.hbm_to_vmem [thread:$0]  %s4, 48, %s229, [#allocation9]
        $region28: #{tpu_custom_call.1} parent=11 // pred_fallthru
          _
      $region12: #{tpu_custom_call.1} parent=5 // pred_fallthru
        _
      %p232 = scmp.lt.s32.totalorder %s19, 4
      // Predicated region
      $region29: #{tpu_custom_call.1} parent=5 // pred_check
        %p233 = pneg %p232
      $region30: #{tpu_custom_call.1} parent=5 // pred_check_branch
        %235 = sbr.rel (%p233) target = $region32
      $region31: #{tpu_custom_call.1} parent=5 // pred_region
        // Predicated region
        $region33: #{tpu_custom_call.1} parent=31 // pred_check
          %p236 = pneg %p53
        $region34: #{tpu_custom_call.1} parent=31 // pred_check_branch
          %238 = sbr.rel (%p236) target = $region36
        $region35: #{tpu_custom_call.1} parent=31 // pred_region
          %s239 = sand.u32 %s43, 1
          %s240 = scalar_lea.sflag [#allocation3], %s239
          %s241 = sand.u32 %s43, 1
          %s242 = smul.addr %s241, 64
          %s243 = scalar_lea.vmem [#allocation2], %s242
          %s244 = smul.u32 8, %s27
          %s246 = ssub.s32 1024, 1024
          %247 = vsyncadd %s240, %s246
          %s248 = smul.addr %s26, 16
          %s249 = sadd.s32 %s244, %s248
          %s250 = smul.addr %s249, 128
          %s251 = scalar_lea.hbm %s0, %s250
          %s252 = sshll.u32 %s243, 4
          %s253 = int_to_ptr.vmem [resolvable:$true] %s252
          %258 = dma.hbm_to_vmem [thread:$0]  %s251, 1024, %s253, %s240, 128, 128, 8
        $region36: #{tpu_custom_call.1} parent=31 // pred_fallthru
          _
      $region32: #{tpu_custom_call.1} parent=5 // pred_fallthru
        _
      %p259 = scmp.le.s32.totalorder 1, %s19
      %p260 = scmp.lt.s32.totalorder %s19, 5
      %p261 = pnand %p259, %p260
      %p262 = pneg %p261
      // Predicated region
      $region37: #{tpu_custom_call.1} parent=5 // pred_check
        _
      $region38: #{tpu_custom_call.1} parent=5 // pred_check_branch
        %264 = sbr.rel (%p261) target = $region40
      $region39: #{tpu_custom_call.1} parent=5 // pred_region
        %s265 = ssub.s32 %s19, 1
        %s266 = sand.u32 %s46, 1
        %s267 = scalar_lea.sflag [#allocation3], %s266
        %s268 = sand.u32 %s46, 1
        %s269 = smul.addr %s268, 64
        %s270 = scalar_lea.vmem [#allocation2], %s269
        // Predicated region
        $region41: #{tpu_custom_call.1} parent=39 // pred_check
          %p271 = pneg %p59
        $region42: #{tpu_custom_call.1} parent=39 // pred_check_branch
          %273 = sbr.rel (%p271) target = $region44
        $region43: #{tpu_custom_call.1} parent=39 // pred_region
          %274 = dma.done %s267, 1024
        $region44: #{tpu_custom_call.1} parent=39 // pred_fallthru
          _
        // Predicated region
        $region45: #{tpu_custom_call.1} parent=39 // pred_check
          %p275 = pneg %p80
        $region46: #{tpu_custom_call.1} parent=39 // pred_check_branch
          %277 = sbr.rel (%p275) target = $region48
        $region47: #{tpu_custom_call.1} parent=39 // pred_region
          %278 = dma.done [#allocation6], 16
        $region48: #{tpu_custom_call.1} parent=39 // pred_fallthru
          _
        // Predicated region
        $region49: #{tpu_custom_call.1} parent=39 // pred_check
          %p279 = pneg %p101
        $region50: #{tpu_custom_call.1} parent=39 // pred_check_branch
          %281 = sbr.rel (%p279) target = $region52
        $region51: #{tpu_custom_call.1} parent=39 // pred_region
          %282 = dma.done [#allocation6], 16
        $region52: #{tpu_custom_call.1} parent=39 // pred_fallthru
          _
        // Predicated region
        $region53: #{tpu_custom_call.1} parent=39 // pred_check
          %p283 = pneg %p122
        $region54: #{tpu_custom_call.1} parent=39 // pred_check_branch
          %285 = sbr.rel (%p283) target = $region56
        $region55: #{tpu_custom_call.1} parent=39 // pred_region
          %286 = dma.done [#allocation9], 6144
        $region56: #{tpu_custom_call.1} parent=39 // pred_fallthru
          _
        // Predicated region
        $region57: #{tpu_custom_call.1} parent=39 // pred_check
          %p287 = pneg %p143
        $region58: #{tpu_custom_call.1} parent=39 // pred_check_branch
          %289 = sbr.rel (%p287) target = $region60
        $region59: #{tpu_custom_call.1} parent=39 // pred_region
          %290 = dma.done [#allocation9], 48
        $region60: #{tpu_custom_call.1} parent=39 // pred_fallthru
          _
        %s291 = sand.u32 %s46, 1
        %s292 = scalar_lea.sflag [#allocation3], %s291
        %s293 = sand.u32 %s46, 1
        %s294 = smul.addr %s293, 64
        %s295 = scalar_lea.vmem [#allocation2], %s294
        %p296 = pneg %p59
        %p297 = pneg %p56
        %p298 = pneg %p80
        %p299 = pneg %p77
        %p300 = pneg %p101
        %p301 = pneg %p98
        %p302 = pneg %p122
        %p303 = pneg %p119
        %p304 = pneg %p143
        %p305 = pneg %p140
        %p306 = pneg %p171
        %p307 = pneg %p168
        %s308 = sand.u32 %s158, 1
        %s309 = scalar_lea.sflag [#allocation4], %s308
        %s310 = sand.u32 %s158, 1
        %s311 = smul.addr %s310, 192
        %s312 = scalar_lea.vmem [#allocation11], %s311
        %s313 = smul.u32 8, %s29
        %s314 = smul.u32 8, %s29
        %v315 = vld [vmem:[%s270] sm:$0xff]
        %v316 = vld [vmem:[%s270 + $0x8] sm:$0xff]
        %v317 = vld [vmem:[%s270 + $0x10] sm:$0xff]
        %v318 = vld [vmem:[%s270 + $0x18] sm:$0xff]
        %v319 = vld [vmem:[%s270 + $0x20] sm:$0xff]
        %v320 = vld [vmem:[%s270 + $0x28] sm:$0xff]
        %v321 = vld [vmem:[%s270 + $0x30] sm:$0xff]
        %v322 = vld [vmem:[%s270 + $0x38] sm:$0xff]
        %v323 = vld [vmem:[#allocation5] sm:$0x1]
        %v324 = vld [vmem:[#allocation7] sm:$0x1]
        %325 = vadd.xlane.f32.xlu0 %v315
        %v326 = vpop.xlane.xlu0 %325
        %327 = vadd.xlane.f32.xlu0 %v316
        %v328 = vpop.xlane.xlu0 %327
        %329 = vadd.xlane.f32.xlu0 %v317
        %v330 = vpop.xlane.xlu0 %329
        %331 = vadd.xlane.f32.xlu0 %v318
        %v332 = vpop.xlane.xlu0 %331
        %333 = vadd.xlane.f32.xlu0 %v319
        %v334 = vpop.xlane.xlu0 %333
        %335 = vadd.xlane.f32.xlu0 %v320
        %v336 = vpop.xlane.xlu0 %335
        %337 = vadd.xlane.f32.xlu0 %v321
        %v338 = vpop.xlane.xlu0 %337
        %339 = vadd.xlane.f32.xlu0 %v322
        %v340 = vpop.xlane.xlu0 %339
        %v341 = vrcp.pop 128.0
        %v342 = vmul.f32 %v326, %v341
        %v343 = vmul.f32 %v328, %v341
        %v344 = vmul.f32 %v330, %v341
        %v345 = vmul.f32 %v332, %v341
        %v346 = vmul.f32 %v334, %v341
        %v347 = vmul.f32 %v336, %v341
        %v348 = vmul.f32 %v338, %v341
        %v349 = vmul.f32 %v340, %v341
        %v350 = vsub.f32 %v315, %v342
        %v351 = vsub.f32 %v316, %v343
        %v352 = vsub.f32 %v317, %v344
        %v353 = vsub.f32 %v318, %v345
        %v354 = vsub.f32 %v319, %v346
        %v355 = vsub.f32 %v320, %v347
        %v356 = vsub.f32 %v321, %v348
        %v357 = vsub.f32 %v322, %v349
        %v358 = vmul.f32 %v350, %v350
        %v359 = vmul.f32 %v351, %v351
        %v360 = vmul.f32 %v352, %v352
        %v361 = vmul.f32 %v353, %v353
        %v362 = vmul.f32 %v354, %v354
        %v363 = vmul.f32 %v355, %v355
        %v364 = vmul.f32 %v356, %v356
        %v365 = vmul.f32 %v357, %v357
        %366 = vadd.xlane.f32.xlu0 %v358
        %v367 = vpop.xlane.xlu0 %366
        %368 = vadd.xlane.f32.xlu0 %v359
        %v369 = vpop.xlane.xlu0 %368
        %370 = vadd.xlane.f32.xlu0 %v360
        %v371 = vpop.xlane.xlu0 %370
        %372 = vadd.xlane.f32.xlu0 %v361
        %v373 = vpop.xlane.xlu0 %372
        %374 = vadd.xlane.f32.xlu0 %v362
        %v375 = vpop.xlane.xlu0 %374
        %376 = vadd.xlane.f32.xlu0 %v363
        %v377 = vpop.xlane.xlu0 %376
        %378 = vadd.xlane.f32.xlu0 %v364
        %v379 = vpop.xlane.xlu0 %378
        %380 = vadd.xlane.f32.xlu0 %v365
        %v381 = vpop.xlane.xlu0 %380
        %v382 = vmul.f32 %v367, %v341
        %v383 = vmul.f32 %v369, %v341
        %v384 = vmul.f32 %v371, %v341
        %v385 = vmul.f32 %v373, %v341
        %v386 = vmul.f32 %v375, %v341
        %v387 = vmul.f32 %v377, %v341
        %v388 = vmul.f32 %v379, %v341
        %v389 = vmul.f32 %v381, %v341
        %v390 = vadd.f32 %v382, 1e-05
        %v391 = vadd.f32 %v383, 1e-05
        %v392 = vadd.f32 %v384, 1e-05
        %v393 = vadd.f32 %v385, 1e-05
        %v394 = vadd.f32 %v386, 1e-05
        %v395 = vadd.f32 %v387, 1e-05
        %v396 = vadd.f32 %v388, 1e-05
        %v397 = vadd.f32 %v389, 1e-05
        %v398 = vrsqrt.pop %v390
        %v399 = vrsqrt.pop %v391
        %v400 = vrsqrt.pop %v392
        %v401 = vrsqrt.pop %v393
        %v402 = vrsqrt.pop %v394
        %v403 = vrsqrt.pop %v395
        %v404 = vrsqrt.pop %v396
        %v405 = vrsqrt.pop %v397
        %v406 = vmul.f32 %v350, %v398
        %v407 = vmul.f32 %v351, %v399
        %v408 = vmul.f32 %v352, %v400
        %v409 = vmul.f32 %v353, %v401
        %v410 = vmul.f32 %v354, %v402
        %v411 = vmul.f32 %v355, %v403
        %v412 = vmul.f32 %v356, %v404
        %v413 = vmul.f32 %v357, %v405
        %v415 = vlaneseq
        %v416 = vshrl.u32 %v415, 7
        %v417 = vsub.s32 0, %v416
        %v418 = vrot.slane %v323, %v417
        %v420 = vmul.f32 %v406, %v418
        %v421 = vmul.f32 %v407, %v418
        %v422 = vmul.f32 %v408, %v418
        %v423 = vmul.f32 %v409, %v418
        %v424 = vmul.f32 %v410, %v418
        %v425 = vmul.f32 %v411, %v418
        %v426 = vmul.f32 %v412, %v418
        %v427 = vmul.f32 %v413, %v418
        %v429 = vlaneseq
        %v430 = vshrl.u32 %v429, 7
        %v431 = vsub.s32 0, %v430
        %v432 = vrot.slane %v324, %v431
        %v434 = vadd.f32 %v420, %v432
        %v435 = vadd.f32 %v421, %v432
        %v436 = vadd.f32 %v422, %v432
        %v437 = vadd.f32 %v423, %v432
        %v438 = vadd.f32 %v424, %v432
        %v439 = vadd.f32 %v425, %v432
        %v440 = vadd.f32 %v426, %v432
        %v441 = vadd.f32 %v427, %v432
        %v442 = vld [vmem:[#allocation8] sm:$0xff]
        %v443 = vld [vmem:[#allocation8 + $0x8] sm:$0xff]
        %v444 = vld [vmem:[#allocation8 + $0x10] sm:$0xff]
        %v445 = vld [vmem:[#allocation8 + $0x18] sm:$0xff]
        %v446 = vld [vmem:[#allocation8 + $0x20] sm:$0xff]
        %v447 = vld [vmem:[#allocation8 + $0x28] sm:$0xff]
        %v448 = vld [vmem:[#allocation8 + $0x30] sm:$0xff]
        %v449 = vld [vmem:[#allocation8 + $0x38] sm:$0xff]
        %v450 = vld [vmem:[#allocation8 + $0x40] sm:$0xff]
        %v451 = vld [vmem:[#allocation8 + $0x48] sm:$0xff]
        %v452 = vld [vmem:[#allocation8 + $0x50] sm:$0xff]
        %v453 = vld [vmem:[#allocation8 + $0x58] sm:$0xff]
        %v454 = vld [vmem:[#allocation8 + $0x60] sm:$0xff]
        %v455 = vld [vmem:[#allocation8 + $0x68] sm:$0xff]
        %v456 = vld [vmem:[#allocation8 + $0x70] sm:$0xff]
        %v457 = vld [vmem:[#allocation8 + $0x78] sm:$0xff]
        %v458 = vld [vmem:[#allocation8 + $0x80] sm:$0xff]
        %v459 = vld [vmem:[#allocation8 + $0x88] sm:$0xff]
        %v460 = vld [vmem:[#allocation8 + $0x90] sm:$0xff]
        %v461 = vld [vmem:[#allocation8 + $0x98] sm:$0xff]
        %v462 = vld [vmem:[#allocation8 + $0xa0] sm:$0xff]
        %v463 = vld [vmem:[#allocation8 + $0xa8] sm:$0xff]
        %v464 = vld [vmem:[#allocation8 + $0xb0] sm:$0xff]
        %v465 = vld [vmem:[#allocation8 + $0xb8] sm:$0xff]
        %v466 = vld [vmem:[#allocation8 + $0xc0] sm:$0xff]
        %v467 = vld [vmem:[#allocation8 + $0xc8] sm:$0xff]
        %v468 = vld [vmem:[#allocation8 + $0xd0] sm:$0xff]
        %v469 = vld [vmem:[#allocation8 + $0xd8] sm:$0xff]
        %v470 = vld [vmem:[#allocation8 + $0xe0] sm:$0xff]
        %v471 = vld [vmem:[#allocation8 + $0xe8] sm:$0xff]
        %v472 = vld [vmem:[#allocation8 + $0xf0] sm:$0xff]
        %v473 = vld [vmem:[#allocation8 + $0xf8] sm:$0xff]
        %v474 = vld [vmem:[#allocation8 + $0x100] sm:$0xff]
        %v475 = vld [vmem:[#allocation8 + $0x108] sm:$0xff]
        %v476 = vld [vmem:[#allocation8 + $0x110] sm:$0xff]
        %v477 = vld [vmem:[#allocation8 + $0x118] sm:$0xff]
        %v478 = vld [vmem:[#allocation8 + $0x120] sm:$0xff]
        %v479 = vld [vmem:[#allocation8 + $0x128] sm:$0xff]
        %v480 = vld [vmem:[#allocation8 + $0x130] sm:$0xff]
        %v481 = vld [vmem:[#allocation8 + $0x138] sm:$0xff]
        %v482 = vld [vmem:[#allocation8 + $0x140] sm:$0xff]
        %v483 = vld [vmem:[#allocation8 + $0x148] sm:$0xff]
        %v484 = vld [vmem:[#allocation8 + $0x150] sm:$0xff]
        %v485 = vld [vmem:[#allocation8 + $0x158] sm:$0xff]
        %v486 = vld [vmem:[#allocation8 + $0x160] sm:$0xff]
        %v487 = vld [vmem:[#allocation8 + $0x168] sm:$0xff]
        %v488 = vld [vmem:[#allocation8 + $0x170] sm:$0xff]
        %v489 = vld [vmem:[#allocation8 + $0x178] sm:$0xff]
        %v490 = vld [vmem:[#allocation10] sm:$0x7]
        %v492 = vlaneseq
        %v493 = vshrl.u32 %v492, 7
        %v494 = vsub.s32 0, %v493
        %v495 = vrot.slane %v490, %v494
        %v496 = vlaneseq
        %v497 = vshrl.u32 %v496, 7
        %v498 = vsub.s32 1, %v497
        %v499 = vrot.slane %v490, %v498
        %v500 = vlaneseq
        %v501 = vshrl.u32 %v500, 7
        %v502 = vsub.s32 2, %v501
        %v503 = vrot.slane %v490, %v502
        %507 = vmatprep.subr.mxu0 %v443
        %508 = vmatpush1.msra.mxu0 %v442
        %509 = vmatprep.subr.mxu0 %v446
        %510 = vmatpush1.msra.mxu0 %v445
        %511 = vmatprep.subr.mxu0 %v449
        %512 = vmatpush1.msra.mxu0 %v448
        %513 = vmatprep.subr.mxu0 %v452
        %514 = vmatpush1.msra.mxu0 %v451
        %515 = vmatprep.subr.mxu0 %v455
        %516 = vmatpush1.msra.mxu0 %v454
        %517 = vmatprep.subr.mxu0 %v458
        %518 = vmatpush1.msra.mxu0 %v457
        %519 = vmatprep.subr.mxu0 %v461
        %520 = vmatpush1.msra.mxu0 %v460
        %521 = vmatprep.subr.mxu0 %v464
        %522 = vmatpush1.msra.mxu0 %v463
        %523 = vmatprep.subr.mxu0 %v467
        %524 = vmatpush1.msra.mxu0 %v466
        %525 = vmatprep.subr.mxu0 %v470
        %526 = vmatpush1.msra.mxu0 %v469
        %527 = vmatprep.subr.mxu0 %v473
        %528 = vmatpush1.msra.mxu0 %v472
        %529 = vmatprep.subr.mxu0 %v476
        %530 = vmatpush1.msra.mxu0 %v475
        %531 = vmatprep.subr.mxu0 %v479
        %532 = vmatpush1.msra.mxu0 %v478
        %533 = vmatprep.subr.mxu0 %v482
        %534 = vmatpush1.msra.mxu0 %v481
        %535 = vmatprep.subr.mxu0 %v485
        %536 = vmatpush1.msra.mxu0 %v484
        %537 = vmatprep.subr.mxu0 %v488
        %538 = vmatpush1.msra.mxu0 %v487
        %539 = vmatprep.subr.mxu0 0.0
        %540 = vmatpush1.msra.mxu0 0.0
        %541 = vmatprep.subr.mxu0 0.0
        %542 = vmatpush1.msra.mxu0 0.0
        %543 = vmatprep.subr.mxu0 0.0
        %544 = vmatpush1.msra.mxu0 0.0
        %545 = vmatprep.subr.mxu0 0.0
        %546 = vmatpush1.msra.mxu0 0.0
        %547 = vmatprep.subr.mxu0 0.0
        %548 = vmatpush1.msra.mxu0 0.0
        %549 = vmatprep.subr.mxu0 0.0
        %550 = vmatpush1.msra.mxu0 0.0
        %551 = vmatprep.subr.mxu0 0.0
        %552 = vmatpush1.msra.mxu0 0.0
        %553 = vmatprep.subr.mxu0 0.0
        %554 = vmatpush1.msra.mxu0 0.0
        %555 = vmatprep.subr.mxu0 0.0
        %556 = vmatpush1.msra.mxu0 0.0
        %557 = vmatprep.subr.mxu0 0.0
        %558 = vmatpush1.msra.mxu0 0.0
        %559 = vmatprep.subr.mxu0 0.0
        %560 = vmatpush1.msra.mxu0 0.0
        %561 = vmatprep.subr.mxu0 0.0
        %562 = vmatpush1.msra.mxu0 0.0
        %563 = vmatprep.subr.mxu0 0.0
        %564 = vmatpush1.msra.mxu0 0.0
        %565 = vmatprep.subr.mxu0 0.0
        %566 = vmatpush1.msra.mxu0 0.0
        %567 = vmatprep.subr.mxu0 0.0
        %568 = vmatpush1.msra.mxu0 0.0
        %569 = vmatprep.subr.mxu0 0.0
        %570 = vmatpush1.msra.mxu0 0.0
        %571 = vmatprep.mubr.f32.mxu0 0.0
        %572 = vmatmul.mubr.f32.gmra.mrb[0].mxu0 %v434
        %v573 = vpop.f32.mrb[0].mxu0
        %v574 = vadd.f32 %v495, %v573
        %v575 = vpop.f32.mrb[0].mxu0
        %v576 = vadd.f32 %v499, %v575
        %577 = vmatprep.mubr.f32.mxu0 0.0
        %578 = vmatmul.mubr.f32.gmra.mrb[0].mxu0 %v435
        %v579 = vpop.f32.mrb[0].mxu0
        %v580 = vadd.f32 %v495, %v579
        %v581 = vpop.f32.mrb[0].mxu0
        %v582 = vadd.f32 %v499, %v581
        %583 = vmatprep.mubr.f32.mxu0 0.0
        %584 = vmatmul.mubr.f32.gmra.mrb[0].mxu0 %v436
        %v585 = vpop.f32.mrb[0].mxu0
        %v586 = vadd.f32 %v495, %v585
        %v587 = vpop.f32.mrb[0].mxu0
        %v588 = vadd.f32 %v499, %v587
        %589 = vmatprep.mubr.f32.mxu0 0.0
        %590 = vmatmul.mubr.f32.gmra.mrb[0].mxu0 %v437
        %v591 = vpop.f32.mrb[0].mxu0
        %v592 = vadd.f32 %v495, %v591
        %v593 = vpop.f32.mrb[0].mxu0
        %v594 = vadd.f32 %v499, %v593
        %595 = vmatprep.mubr.f32.mxu0 0.0
        %596 = vmatmul.mubr.f32.gmra.mrb[0].mxu0 %v438
        %v597 = vpop.f32.mrb[0].mxu0
        %v598 = vadd.f32 %v495, %v597
        %v599 = vpop.f32.mrb[0].mxu0
        %v600 = vadd.f32 %v499, %v599
        %601 = vmatprep.mubr.f32.mxu0 0.0
        %602 = vmatmul.mubr.f32.gmra.mrb[0].mxu0 %v439
        %v603 = vpop.f32.mrb[0].mxu0
        %v604 = vadd.f32 %v495, %v603
        %v605 = vpop.f32.mrb[0].mxu0
        %v606 = vadd.f32 %v499, %v605
        %607 = vmatprep.mubr.f32.mxu0 0.0
        %608 = vmatmul.mubr.f32.gmra.mrb[0].mxu0 %v440
        %v609 = vpop.f32.mrb[0].mxu0
        %v610 = vadd.f32 %v495, %v609
        %v611 = vpop.f32.mrb[0].mxu0
        %v612 = vadd.f32 %v499, %v611
        %613 = vmatprep.mubr.f32.mxu0 0.0
        %614 = vmatmul.mubr.f32.gmra.mrb[0].mxu0 %v441
        %v615 = vpop.f32.mrb[0].mxu0
        %v616 = vadd.f32 %v495, %v615
        %v617 = vpop.f32.mrb[0].mxu0
        %v618 = vadd.f32 %v499, %v617
        %619 = vdwg.mxu0
        %620 = vmatprep.subr.mxu0 0.0
        %621 = vmatpush1.msra.mxu0 %v444
        %622 = vmatprep.subr.mxu0 0.0
        %623 = vmatpush1.msra.mxu0 %v447
        %624 = vmatprep.subr.mxu0 0.0
        %625 = vmatpush1.msra.mxu0 %v450
        %626 = vmatprep.subr.mxu0 0.0
        %627 = vmatpush1.msra.mxu0 %v453
        %628 = vmatprep.subr.mxu0 0.0
        %629 = vmatpush1.msra.mxu0 %v456
        %630 = vmatprep.subr.mxu0 0.0
        %631 = vmatpush1.msra.mxu0 %v459
        %632 = vmatprep.subr.mxu0 0.0
        %633 = vmatpush1.msra.mxu0 %v462
        %634 = vmatprep.subr.mxu0 0.0
        %635 = vmatpush1.msra.mxu0 %v465
        %636 = vmatprep.subr.mxu0 0.0
        %637 = vmatpush1.msra.mxu0 %v468
        %638 = vmatprep.subr.mxu0 0.0
        %639 = vmatpush1.msra.mxu0 %v471
        %640 = vmatprep.subr.mxu0 0.0
        %641 = vmatpush1.msra.mxu0 %v474
        %642 = vmatprep.subr.mxu0 0.0
        %643 = vmatpush1.msra.mxu0 %v477
        %644 = vmatprep.subr.mxu0 0.0
        %645 = vmatpush1.msra.mxu0 %v480
        %646 = vmatprep.subr.mxu0 0.0
        %647 = vmatpush1.msra.mxu0 %v483
        %648 = vmatprep.subr.mxu0 0.0
        %649 = vmatpush1.msra.mxu0 %v486
        %650 = vmatprep.subr.mxu0 0.0
        %651 = vmatpush1.msra.mxu0 %v489
        %652 = vmatprep.subr.mxu0 0.0
        %653 = vmatpush1.msra.mxu0 0.0
        %654 = vmatprep.subr.mxu0 0.0
        %655 = vmatpush1.msra.mxu0 0.0
        %656 = vmatprep.subr.mxu0 0.0
        %657 = vmatpush1.msra.mxu0 0.0
        %658 = vmatprep.subr.mxu0 0.0
        %659 = vmatpush1.msra.mxu0 0.0
        %660 = vmatprep.subr.mxu0 0.0
        %661 = vmatpush1.msra.mxu0 0.0
        %662 = vmatprep.subr.mxu0 0.0
        %663 = vmatpush1.msra.mxu0 0.0
        %664 = vmatprep.subr.mxu0 0.0
        %665 = vmatpush1.msra.mxu0 0.0
        %666 = vmatprep.subr.mxu0 0.0
        %667 = vmatpush1.msra.mxu0 0.0
        %668 = vmatprep.subr.mxu0 0.0
        %669 = vmatpush1.msra.mxu0 0.0
        %670 = vmatprep.subr.mxu0 0.0
        %671 = vmatpush1.msra.mxu0 0.0
        %672 = vmatprep.subr.mxu0 0.0
        %673 = vmatpush1.msra.mxu0 0.0
        %674 = vmatprep.subr.mxu0 0.0
        %675 = vmatpush1.msra.mxu0 0.0
        %676 = vmatprep.subr.mxu0 0.0
        %677 = vmatpush1.msra.mxu0 0.0
        %678 = vmatprep.subr.mxu0 0.0
        %679 = vmatpush1.msra.mxu0 0.0
        %680 = vmatprep.subr.mxu0 0.0
        %681 = vmatpush1.msra.mxu0 0.0
        %682 = vmatprep.subr.mxu0 0.0
        %683 = vmatpush1.msra.mxu0 0.0
        %684 = vmatprep.mubr.f32.mxu0 0.0
        %685 = vmatmul.mubr.f32.gmra.mrb[0].mxu0 %v434
        %v686 = vpop.f32.mrb[0].mxu0
        %v687 = vadd.f32 %v503, %v686
        %v688 = vpop.f32.mrb[0].mxu0
        %689 = vmatprep.mubr.f32.mxu0 0.0
        %690 = vmatmul.mubr.f32.gmra.mrb[0].mxu0 %v435
        %v691 = vpop.f32.mrb[0].mxu0
        %v692 = vadd.f32 %v503, %v691
        %v693 = vpop.f32.mrb[0].mxu0
        %694 = vmatprep.mubr.f32.mxu0 0.0
        %695 = vmatmul.mubr.f32.gmra.mrb[0].mxu0 %v436
        %v696 = vpop.f32.mrb[0].mxu0
        %v697 = vadd.f32 %v503, %v696
        %v698 = vpop.f32.mrb[0].mxu0
        %699 = vmatprep.mubr.f32.mxu0 0.0
        %700 = vmatmul.mubr.f32.gmra.mrb[0].mxu0 %v437
        %v701 = vpop.f32.mrb[0].mxu0
        %v702 = vadd.f32 %v503, %v701
        %v703 = vpop.f32.mrb[0].mxu0
        %704 = vmatprep.mubr.f32.mxu0 0.0
        %705 = vmatmul.mubr.f32.gmra.mrb[0].mxu0 %v438
        %v706 = vpop.f32.mrb[0].mxu0
        %v707 = vadd.f32 %v503, %v706
        %v708 = vpop.f32.mrb[0].mxu0
        %709 = vmatprep.mubr.f32.mxu0 0.0
        %710 = vmatmul.mubr.f32.gmra.mrb[0].mxu0 %v439
        %v711 = vpop.f32.mrb[0].mxu0
        %v712 = vadd.f32 %v503, %v711
        %v713 = vpop.f32.mrb[0].mxu0
        %714 = vmatprep.mubr.f32.mxu0 0.0
        %715 = vmatmul.mubr.f32.gmra.mrb[0].mxu0 %v440
        %v716 = vpop.f32.mrb[0].mxu0
        %v717 = vadd.f32 %v503, %v716
        %v718 = vpop.f32.mrb[0].mxu0
        %719 = vmatprep.mubr.f32.mxu0 0.0
        %720 = vmatmul.mubr.f32.gmra.mrb[0].mxu0 %v441
        %v721 = vpop.f32.mrb[0].mxu0
        %v722 = vadd.f32 %v503, %v721
        %v723 = vpop.f32.mrb[0].mxu0
        %724 = vdwg.mxu0
        %725 = vst [vmem:[%s312] sm:$0xff] %v574
        %726 = vst [vmem:[%s312 + $0x8] sm:$0xff] %v576
        %727 = vst [vmem:[%s312 + $0x10] sm:$0xff] %v687
        %728 = vst [vmem:[%s312 + $0x18] sm:$0xff] %v580
        %729 = vst [vmem:[%s312 + $0x20] sm:$0xff] %v582
        %730 = vst [vmem:[%s312 + $0x28] sm:$0xff] %v692
        %731 = vst [vmem:[%s312 + $0x30] sm:$0xff] %v586
        %732 = vst [vmem:[%s312 + $0x38] sm:$0xff] %v588
        %733 = vst [vmem:[%s312 + $0x40] sm:$0xff] %v697
        %734 = vst [vmem:[%s312 + $0x48] sm:$0xff] %v592
        %735 = vst [vmem:[%s312 + $0x50] sm:$0xff] %v594
        %736 = vst [vmem:[%s312 + $0x58] sm:$0xff] %v702
        %737 = vst [vmem:[%s312 + $0x60] sm:$0xff] %v598
        %738 = vst [vmem:[%s312 + $0x68] sm:$0xff] %v600
        %739 = vst [vmem:[%s312 + $0x70] sm:$0xff] %v707
        %740 = vst [vmem:[%s312 + $0x78] sm:$0xff] %v604
        %741 = vst [vmem:[%s312 + $0x80] sm:$0xff] %v606
        %742 = vst [vmem:[%s312 + $0x88] sm:$0xff] %v712
        %743 = vst [vmem:[%s312 + $0x90] sm:$0xff] %v610
        %744 = vst [vmem:[%s312 + $0x98] sm:$0xff] %v612
        %745 = vst [vmem:[%s312 + $0xa0] sm:$0xff] %v717
        %746 = vst [vmem:[%s312 + $0xa8] sm:$0xff] %v616
        %747 = vst [vmem:[%s312 + $0xb0] sm:$0xff] %v618
        %748 = vst [vmem:[%s312 + $0xb8] sm:$0xff] %v722
        %s749 = sand.u32 %s158, 1
        %s750 = scalar_lea.sflag [#allocation4], %s749
        %s751 = sand.u32 %s158, 1
        %s752 = smul.addr %s751, 192
        %s753 = scalar_lea.vmem [#allocation11], %s752
        // Predicated region
        $region61: #{tpu_custom_call.1} parent=39 // pred_check
          %p754 = pneg %p168
        $region62: #{tpu_custom_call.1} parent=39 // pred_check_branch
          %756 = sbr.rel (%p754) target = $region64
        $region63: #{tpu_custom_call.1} parent=39 // pred_region
          %s757 = smul.u32 8, %s29
          %s759 = ssub.s32 3072, 3072
          %760 = vsyncadd %s750, %s759
          %s761 = smul.addr %s757, 3
          %s762 = smul.addr %s28, 48
          %s763 = sadd.s32 %s761, %s762
          %s764 = smul.addr %s763, 128
          %s765 = scalar_lea.hbm %s5, %s764
          %s766 = sshll.u32 %s753, 4
          %s767 = int_to_ptr.vmem [resolvable:$true] %s766
          %772 = dma.vmem_to_hbm [thread:$0]  %s767, 3072, %s765, %s750, 384, 384, 24
        $region64: #{tpu_custom_call.1} parent=39 // pred_fallthru
          _
      $region40: #{tpu_custom_call.1} parent=5 // pred_fallthru
        _
      %p773 = scmp.le.s32.totalorder 2, %s19
      // Predicated region
      $region65: #{tpu_custom_call.1} parent=5 // pred_check
        %p774 = pneg %p773
      $region66: #{tpu_custom_call.1} parent=5 // pred_check_branch
        %776 = sbr.rel (%p774) target = $region68
      $region67: #{tpu_custom_call.1} parent=5 // pred_region
        %s777 = ssub.s32 %s19, 2
        // Predicated region
        $region69: #{tpu_custom_call.1} parent=67 // pred_check
          %p778 = pneg %p174
        $region70: #{tpu_custom_call.1} parent=67 // pred_check_branch
          %780 = sbr.rel (%p778) target = $region72
        $region71: #{tpu_custom_call.1} parent=67 // pred_region
          %s781 = sand.u32 %s159, 1
          %s782 = scalar_lea.sflag [#allocation4], %s781
          %s783 = sand.u32 %s159, 1
          %s784 = smul.addr %s783, 192
          %s785 = scalar_lea.vmem [#allocation11], %s784
          %786 = dma.done %s782, 3072
        $region72: #{tpu_custom_call.1} parent=67 // pred_fallthru
          _
      $region68: #{tpu_custom_call.1} parent=5 // pred_fallthru
        _
    $region6: #{tpu_custom_call.1} parent=1 // loop_footer
      %s23 = sadd.s32 1, %s19
    $region7: #{tpu_custom_call.1} parent=1 // loop_footer_branch
      %18 = sbr.rel target = $region3
    $region8: #{tpu_custom_call.1} parent=1 // loop_exit
      _
    %787 = vsyncpa [#allocation3], 1
    %s788 = scalar_lea.sflag [#allocation3], 1
    %789 = vsyncpa %s788, 1
    %790 = vsyncpa [#allocation6], 1
    %791 = vsyncpa [#allocation9], 1
    %792 = vsyncpa [#allocation4], 1
    %s793 = scalar_lea.sflag [#allocation4], 1
    %794 = vsyncpa %s793, 1

</llo_original>
